<compile_context>
chip_gen: v5e
topology: v5e:2x2
jax: 0.10.0
libtpu: 0.0.40
codegen_flags: <defaults>
</compile_context>

<pallas_src>
import jax
import jax.numpy as jnp
from jax import lax
from jax.experimental import pallas as pl
from jax.experimental.pallas import tpu as pltpu

# get_bond_feature_dims() from ogb.utils.features:
#   [num bond types, num bond stereo, num is_conjugated] = [5, 6, 2]
FULL_BOND_FEATURE_DIMS = [5, 6, 2]
NUM_FEATS = len(FULL_BOND_FEATURE_DIMS)
PAD_ROWS = 8            # each tiny vocab padded up to the sublane multiple
SUBLANE = 8
MIN_SPLIT_ROWS = 512    # only split a small-E input in two if halves are this big


def _round_up(x, m):
    return ((x + m - 1) // m) * m


def bond_encoder_kernel(edge_ref, tables_ref, out_ref):
    # edge_ref:   (TE, F)            int32   (tile of edges)
    # tables_ref: (F*PAD_ROWS, D)    float32 (fused, vocab-padded tables)
    # out_ref:    (TE, D)            out_dtype
    te, f = edge_ref.shape
    edges = edge_ref[...]                                           # (TE, F)

    # Concat-free fused one-hot over all features: (TE, F*PAD_ROWS).
    # Feature i's index is shifted into its own 8-row slab; padded table rows
    # are zero so out-of-vocab / pad indices contribute exactly zero.
    col = lax.broadcasted_iota(jnp.int32, (te, f * PAD_ROWS), 1)
    onehot = jnp.zeros((te, f * PAD_ROWS), jnp.float32)
    for i in range(f):
        onehot = onehot + (
            (edges[:, i:i + 1] + i * PAD_ROWS) == col
        ).astype(jnp.float32)

    # Single MXU push: (TE, F*8) @ (F*8, D) -> (TE, D).
    out_ref[...] = jnp.dot(
        onehot, tables_ref[...], preferred_element_type=jnp.float32
    ).astype(out_ref.dtype)


def bond_encoder(edge_attr, tables, *, tile_edges=4096, out_dtype=jnp.float32):
    """edge_attr: (E, F) int32, tables: (F*PAD_ROWS, D) f32 -> (E, D) out_dtype.

    Notes:
      * D is used at its native width (no lane padding, no column slice).
      * Ragged E is padded with index PAD_ROWS-1, so padded rows are exact
        zeros; the row slice back to E is purely cosmetic for the caller.
      * Out-of-vocab indices (>= vocab size) silently map to zero rows.
    """
    E, F = edge_attr.shape
    FP, D = tables.shape
    assert FP == F * PAD_ROWS, "tables must be the fused (F*PAD_ROWS, D) stack"
    tables = tables.astype(jnp.float32)

    # Tile selection: big tiles for the HBM-bandwidth-bound writeback; for
    # small E use one tile unless splitting gives each TensorCore a meaningful
    # chunk (v7x megacore) — avoids a pointless extra step on single-TC chips.
    te = int(tile_edges)
    if E <= te:
        half = _round_up(pl.cdiv(E, 2), SUBLANE)
        te = half if half >= MIN_SPLIT_ROWS else _round_up(max(E, SUBLANE), SUBLANE)

    E_pad = _round_up(E, te)
    if E_pad != E:
        # Pad with PAD_ROWS-1 (=7): that row is a zero pad-row in every
        # per-feature table, so padded edge rows produce exact-zero outputs.
        edge_attr = jnp.pad(
            edge_attr, ((0, E_pad - E), (0, 0)), constant_values=PAD_ROWS - 1
        )

    out_bytes = jnp.dtype(out_dtype).itemsize
    cost = pl.CostEstimate(
        flops=2 * E_pad * FP * D,
        transcendentals=0,
        bytes_accessed=(E_pad * F * 4            # edge indices in
                        + FP * D * 4             # fused table in
                        + E_pad * D * out_bytes  # embeddings out
                        ),
    )

    out = pl.pallas_call(
        bond_encoder_kernel,
        out_shape=jax.ShapeDtypeStruct((E_pad, D), out_dtype),
        grid_spec=pltpu.PrefetchScalarGridSpec(
            num_scalar_prefetch=0,
            grid=(E_pad // te,),
            in_specs=[
                # (te, F): F equals the full last dim -> legal block shape.
                pl.BlockSpec((te, F), lambda e: (e, 0)),
                # Full fused table, resident every step.
                pl.BlockSpec((FP, D), lambda e: (0, 0)),
            ],
            # (te, D): D equals the full last dim -> no lane padding needed.
            out_specs=pl.BlockSpec((te, D), lambda e: (e, 0)),
        ),
        compiler_params=pltpu.CompilerParams(
            dimension_semantics=("parallel",),
            # Room for large double-buffered output tiles on every generation
            # (v5e default scoped VMEM is only 16 MiB; v7x physical is 64 MiB).
            vmem_limit_bytes=48 << 20,
        ),
        cost_estimate=cost,
    )(edge_attr, tables)

    if E_pad != E:
        out = out[:E]   # padded rows are exact zeros; slice kept for API shape
    return out


def init_bond_embedding_tables(key, emb_dim):
    """Xavier-uniform per table (matches torch.nn.init.xavier_uniform_),
    vocab-padded to PAD_ROWS rows each, fused into (F*PAD_ROWS, emb_dim)."""
    tables = []
    for i, dim in enumerate(FULL_BOND_FEATURE_DIMS):
        k = jax.random.fold_in(key, i)
        bound = (6.0 / (dim + emb_dim)) ** 0.5
        w = jax.random.uniform(k, (dim, emb_dim), jnp.float32, -bound, bound)
        w = jnp.pad(w, ((0, PAD_ROWS - dim), (0, 0)))
        tables.append(w)
    return jnp.concatenate(tables, axis=0)


if __name__ == "__main__":
    key = jax.random.PRNGKey(0)
    emb_dim = 300     # real OGB width: exercises the non-128-multiple lane path
    num_edges = 200   # deliberately ragged: not a tile / sublane multiple

    # Deterministic parameters.
    tables = init_bond_embedding_tables(jax.random.fold_in(key, 1000), emb_dim)

    # Deterministic integer bond features, each column within its vocab.
    cols = []
    for i, dim in enumerate(FULL_BOND_FEATURE_DIMS):
        k = jax.random.fold_in(key, i)
        cols.append(jax.random.randint(k, (num_edges,), 0, dim, jnp.int32))
    edge_attr = jnp.stack(cols, axis=1)  # (E, F) int32

    # Pure-JAX reference: sum_i tables_i[edge_attr[:, i]]
    ref = jnp.zeros((num_edges, emb_dim), jnp.float32)
    for i in range(NUM_FEATS):
        tab_i = tables[i * PAD_ROWS:(i + 1) * PAD_ROWS]
        ref = ref + jnp.take(tab_i, edge_attr[:, i], axis=0)

    # f32 output path (default, matches the PyTorch module).
    out = jax.block_until_ready(bond_encoder(edge_attr, tables))
    assert out.shape == (num_edges, emb_dim)
    assert out.dtype == jnp.float32
    assert jnp.allclose(out, ref, atol=1e-5, rtol=1e-5)

    # bf16 output path (optional downstream optimization; halves HBM writes).
    out_bf16 = jax.block_until_ready(
        bond_encoder(edge_attr, tables, out_dtype=jnp.bfloat16)
    )
    assert out_bf16.shape == (num_edges, emb_dim)
    assert out_bf16.dtype == jnp.bfloat16
    assert jnp.allclose(out_bf16.astype(jnp.float32), ref, atol=1e-2, rtol=1e-2)

    print("KERNEL_OK")
</pallas_src>

<mosaic_0001>
module attributes {stable_mosaic.version = 11 : i64} {
  func.func @bond_encoder_kernel(%arg0: i32, %arg1: memref<200x3xi32, #tpu.memory_space<vmem>>, %arg2: memref<24x300xf32, #tpu.memory_space<vmem>>, %arg3: memref<200x300xf32, #tpu.memory_space<vmem>>) attributes {dimension_semantics = [#tpu.dimension_semantics<parallel>], iteration_bounds = array<i64: 1>, scalar_prefetch = 0 : i64, scratch_operands = 0 : i64, tpu.core_type = #tpu.core_type<tc>, window_params = [{transform_indices = @transform_0, window_bounds = array<i64: 200, 3>}, {pipeline_mode = #tpu.pipeline_mode<synchronous>, transform_indices = @transform_1, window_bounds = array<i64: 24, 300>}, {transform_indices = @transform_2, window_bounds = array<i64: 200, 300>}]} {
    %c0 = arith.constant 0 : index
    %c0_0 = arith.constant 0 : index
    %0 = vector.load %arg1[%c0, %c0_0] : memref<200x3xi32, #tpu.memory_space<vmem>>, vector<200x3xi32>
    %1 = tpu.iota {dimensions = array<i32: 1>} : vector<200x24xi32>
    %cst = arith.constant 0.000000e+00 : f32
    %2 = vector.broadcast %cst : f32 to vector<200x24xf32>
    %3 = vector.extract_strided_slice %0 {offsets = [0, 0], sizes = [200, 1], strides = [1, 1]} : vector<200x3xi32> to vector<200x1xi32>
    %c0_i32 = arith.constant 0 : i32
    %4 = vector.broadcast %c0_i32 : i32 to vector<200x1xi32>
    %5 = arith.addi %3, %4 : vector<200x1xi32>
    %6 = vector.broadcast %5 : vector<200x1xi32> to vector<200x24xi32>
    %7 = arith.cmpi eq, %6, %1 : vector<200x24xi32>
    %8 = arith.extui %7 : vector<200x24xi1> to vector<200x24xi32>
    %9 = arith.sitofp %8 : vector<200x24xi32> to vector<200x24xf32>
    %10 = arith.addf %2, %9 : vector<200x24xf32>
    %11 = vector.extract_strided_slice %0 {offsets = [0, 1], sizes = [200, 1], strides = [1, 1]} : vector<200x3xi32> to vector<200x1xi32>
    %c8_i32 = arith.constant 8 : i32
    %12 = vector.broadcast %c8_i32 : i32 to vector<200x1xi32>
    %13 = arith.addi %11, %12 : vector<200x1xi32>
    %14 = vector.broadcast %13 : vector<200x1xi32> to vector<200x24xi32>
    %15 = arith.cmpi eq, %14, %1 : vector<200x24xi32>
    %16 = arith.extui %15 : vector<200x24xi1> to vector<200x24xi32>
    %17 = arith.sitofp %16 : vector<200x24xi32> to vector<200x24xf32>
    %18 = arith.addf %10, %17 : vector<200x24xf32>
    %19 = vector.extract_strided_slice %0 {offsets = [0, 2], sizes = [200, 1], strides = [1, 1]} : vector<200x3xi32> to vector<200x1xi32>
    %c16_i32 = arith.constant 16 : i32
    %20 = vector.broadcast %c16_i32 : i32 to vector<200x1xi32>
    %21 = arith.addi %19, %20 : vector<200x1xi32>
    %22 = vector.broadcast %21 : vector<200x1xi32> to vector<200x24xi32>
    %23 = arith.cmpi eq, %22, %1 : vector<200x24xi32>
    %24 = arith.extui %23 : vector<200x24xi1> to vector<200x24xi32>
    %25 = arith.sitofp %24 : vector<200x24xi32> to vector<200x24xf32>
    %26 = arith.addf %18, %25 : vector<200x24xf32>
    %c0_1 = arith.constant 0 : index
    %c0_2 = arith.constant 0 : index
    %27 = vector.load %arg2[%c0_1, %c0_2] : memref<24x300xf32, #tpu.memory_space<vmem>>, vector<24x300xf32>
    %cst_3 = arith.constant dense<0.000000e+00> : vector<200x300xf32>
    %28 = tpu.matmul %26, %27, %cst_3 {dimension_numbers = #tpu.dot_dimension_numbers<[1], [0], [0], [1], [0, 0, 1, 1], [], []>} : vector<200x24xf32>, vector<24x300xf32>, vector<200x300xf32> -> vector<200x300xf32>
    %c0_4 = arith.constant 0 : index
    %c0_5 = arith.constant 0 : index
    %29 = vector.load %arg3[%c0_4, %c0_5] : memref<200x300xf32, #tpu.memory_space<vmem>>, vector<200x300xf32>
    tpu.vector_store %arg3[%c0_4, %c0_5], %28 {strides = array<i32>} : memref<200x300xf32, #tpu.memory_space<vmem>>, vector<200x300xf32>,
    return
  }
  func.func @transform_0(%arg0: i32) -> (i32, i32) {
    %c0_i32 = arith.constant 0 : i32
    %c0_i32_0 = arith.constant 0 : i32
    return %arg0, %c0_i32 : i32, i32
  }
  func.func @transform_1(%arg0: i32) -> (i32, i32) {
    %c0_i32 = arith.constant 0 : i32
    %c0_i32_0 = arith.constant 0 : i32
    %c0_i32_1 = arith.constant 0 : i32
    return %c0_i32, %c0_i32_0 : i32, i32
  }
  func.func @transform_2(%arg0: i32) -> (i32, i32) {
    %c0_i32 = arith.constant 0 : i32
    %c0_i32_0 = arith.constant 0 : i32
    return %arg0, %c0_i32 : i32, i32
  }
}

</mosaic_0001>

<llo_original>
// kernel: tpu_custom_call.1
$region0: #{tpu_custom_call.1}
  #allocation0 [shape = 'u32[]', space=smem, size = 0x4, offset = 0x4, fixed_abs, tag = 'smem constant byte address 0x4 - core index']
  #allocation1 [shape = 'u32[72,128]{1,0:T(1,128)}', space=vmem, size = 0x9000, scoped, tag = 'internal scratch']
  %s0 = inlined_call_operand.vmem [shape: s32[200,3], index: 0, kind: input, shape index: {}]
  %s1 = inlined_call_operand.vmem [shape: f32[24,300], index: 1, kind: input, shape index: {}]
  %s2 = inlined_call_operand.hbm [shape: f32[200,300], index: 2, kind: output, shape index: {}]
  %s3 = sld [smem:[#allocation0]]
  $region18: #{tpu_custom_call.1} parent=0
    _
  %s5 = ssub.s32 1, %s3
  %s6 = scalar_select 0, %s5, %s3
  $region1: #{tpu_custom_call.1} parent=0
    #allocation2 [shape = 'u8[307200]{0}', space=vmem, size = 0x4b000, scoped, tag = 'output window, operand 0, single buffered']
    #allocation3 [shape = 's32[1]{0}', space=sflag, size = 0x4, scoped, tag = 'scoped memory for tpu_custom_call.1']
    %7 = vsyncpa [#allocation3], 0
    // Predicated region
    $region2: #{tpu_custom_call.1} parent=1 // pred_check
      _
    $region3: #{tpu_custom_call.1} parent=1 // pred_check_branch
      %9 = sbr.rel (0) target = $region5
    $region4: #{tpu_custom_call.1} parent=1 // pred_region
      _
    $region5: #{tpu_custom_call.1} parent=1 // pred_fallthru
      _
    // Predicated region
    $region6: #{tpu_custom_call.1} parent=1 // pred_check
      _
    $region7: #{tpu_custom_call.1} parent=1 // pred_check_branch
      %11 = sbr.rel (0) target = $region9
    $region8: #{tpu_custom_call.1} parent=1 // pred_region
      _
    $region9: #{tpu_custom_call.1} parent=1 // pred_fallthru
      _
    %v12 = vld [vmem:[%s0] sm:$0xff]
    %v13 = vld [vmem:[%s0 + $0x8] sm:$0xff]
    %v14 = vld [vmem:[%s0 + $0x10] sm:$0xff]
    %v15 = vld [vmem:[%s0 + $0x18] sm:$0xff]
    %v16 = vld [vmem:[%s0 + $0x20] sm:$0xff]
    %v17 = vld [vmem:[%s0 + $0x28] sm:$0xff]
    %v18 = vld [vmem:[%s0 + $0x30] sm:$0xff]
    %v19 = vld [vmem:[%s0 + $0x38] sm:$0xff]
    %v20 = vld [vmem:[%s0 + $0x40] sm:$0xff]
    %v21 = vld [vmem:[%s0 + $0x48] sm:$0xff]
    %v22 = vld [vmem:[%s0 + $0x50] sm:$0xff]
    %v23 = vld [vmem:[%s0 + $0x58] sm:$0xff]
    %v24 = vld [vmem:[%s0 + $0x60] sm:$0xff]
    %v25 = vld [vmem:[%s0 + $0x68] sm:$0xff]
    %v26 = vld [vmem:[%s0 + $0x70] sm:$0xff]
    %v27 = vld [vmem:[%s0 + $0x78] sm:$0xff]
    %v28 = vld [vmem:[%s0 + $0x80] sm:$0xff]
    %v29 = vld [vmem:[%s0 + $0x88] sm:$0xff]
    %v30 = vld [vmem:[%s0 + $0x90] sm:$0xff]
    %v31 = vld [vmem:[%s0 + $0x98] sm:$0xff]
    %v32 = vld [vmem:[%s0 + $0xa0] sm:$0xff]
    %v33 = vld [vmem:[%s0 + $0xa8] sm:$0xff]
    %v34 = vld [vmem:[%s0 + $0xb0] sm:$0xff]
    %v35 = vld [vmem:[%s0 + $0xb8] sm:$0xff]
    %v36 = vld [vmem:[%s0 + $0xc0] sm:$0xff]
    %v37 = vlaneseq
    %v38 = vand.u32 %v37, 127
    %39 = vset.pattern.permute.xlu0 0
    %40 = vperm.xlu0 %39, %v12
    %v41 = vpop.permute.xlu0 %40
    %42 = vset.pattern.permute.xlu0 0
    %43 = vperm.xlu0 %42, %v13
    %v44 = vpop.permute.xlu0 %43
    %45 = vset.pattern.permute.xlu0 0
    %46 = vperm.xlu0 %45, %v14
    %v47 = vpop.permute.xlu0 %46
    %48 = vset.pattern.permute.xlu0 0
    %49 = vperm.xlu0 %48, %v15
    %v50 = vpop.permute.xlu0 %49
    %51 = vset.pattern.permute.xlu0 0
    %52 = vperm.xlu0 %51, %v16
    %v53 = vpop.permute.xlu0 %52
    %54 = vset.pattern.permute.xlu0 0
    %55 = vperm.xlu0 %54, %v17
    %v56 = vpop.permute.xlu0 %55
    %57 = vset.pattern.permute.xlu0 0
    %58 = vperm.xlu0 %57, %v18
    %v59 = vpop.permute.xlu0 %58
    %60 = vset.pattern.permute.xlu0 0
    %61 = vperm.xlu0 %60, %v19
    %v62 = vpop.permute.xlu0 %61
    %63 = vset.pattern.permute.xlu0 0
    %64 = vperm.xlu0 %63, %v20
    %v65 = vpop.permute.xlu0 %64
    %66 = vset.pattern.permute.xlu0 0
    %67 = vperm.xlu0 %66, %v21
    %v68 = vpop.permute.xlu0 %67
    %69 = vset.pattern.permute.xlu0 0
    %70 = vperm.xlu0 %69, %v22
    %v71 = vpop.permute.xlu0 %70
    %72 = vset.pattern.permute.xlu0 0
    %73 = vperm.xlu0 %72, %v23
    %v74 = vpop.permute.xlu0 %73
    %75 = vset.pattern.permute.xlu0 0
    %76 = vperm.xlu0 %75, %v24
    %v77 = vpop.permute.xlu0 %76
    %78 = vset.pattern.permute.xlu0 0
    %79 = vperm.xlu0 %78, %v25
    %v80 = vpop.permute.xlu0 %79
    %81 = vset.pattern.permute.xlu0 0
    %82 = vperm.xlu0 %81, %v26
    %v83 = vpop.permute.xlu0 %82
    %84 = vset.pattern.permute.xlu0 0
    %85 = vperm.xlu0 %84, %v27
    %v86 = vpop.permute.xlu0 %85
    %87 = vset.pattern.permute.xlu0 0
    %88 = vperm.xlu0 %87, %v28
    %v89 = vpop.permute.xlu0 %88
    %90 = vset.pattern.permute.xlu0 0
    %91 = vperm.xlu0 %90, %v29
    %v92 = vpop.permute.xlu0 %91
    %93 = vset.pattern.permute.xlu0 0
    %94 = vperm.xlu0 %93, %v30
    %v95 = vpop.permute.xlu0 %94
    %96 = vset.pattern.permute.xlu0 0
    %97 = vperm.xlu0 %96, %v31
    %v98 = vpop.permute.xlu0 %97
    %99 = vset.pattern.permute.xlu0 0
    %100 = vperm.xlu0 %99, %v32
    %v101 = vpop.permute.xlu0 %100
    %102 = vset.pattern.permute.xlu0 0
    %103 = vperm.xlu0 %102, %v33
    %v104 = vpop.permute.xlu0 %103
    %105 = vset.pattern.permute.xlu0 0
    %106 = vperm.xlu0 %105, %v34
    %v107 = vpop.permute.xlu0 %106
    %108 = vset.pattern.permute.xlu0 0
    %109 = vperm.xlu0 %108, %v35
    %v110 = vpop.permute.xlu0 %109
    %111 = vset.pattern.permute.xlu0 0
    %112 = vperm.xlu0 %111, %v36
    %v113 = vpop.permute.xlu0 %112
    %vm114 = vcmp.eq.s32.totalorder %v41, %v38
    %vm115 = vcmp.eq.s32.totalorder %v44, %v38
    %vm116 = vcmp.eq.s32.totalorder %v47, %v38
    %vm117 = vcmp.eq.s32.totalorder %v50, %v38
    %vm118 = vcmp.eq.s32.totalorder %v53, %v38
    %vm119 = vcmp.eq.s32.totalorder %v56, %v38
    %vm120 = vcmp.eq.s32.totalorder %v59, %v38
    %vm121 = vcmp.eq.s32.totalorder %v62, %v38
    %vm122 = vcmp.eq.s32.totalorder %v65, %v38
    %vm123 = vcmp.eq.s32.totalorder %v68, %v38
    %vm124 = vcmp.eq.s32.totalorder %v71, %v38
    %vm125 = vcmp.eq.s32.totalorder %v74, %v38
    %vm126 = vcmp.eq.s32.totalorder %v77, %v38
    %vm127 = vcmp.eq.s32.totalorder %v80, %v38
    %vm128 = vcmp.eq.s32.totalorder %v83, %v38
    %vm129 = vcmp.eq.s32.totalorder %v86, %v38
    %vm130 = vcmp.eq.s32.totalorder %v89, %v38
    %vm131 = vcmp.eq.s32.totalorder %v92, %v38
    %vm132 = vcmp.eq.s32.totalorder %v95, %v38
    %vm133 = vcmp.eq.s32.totalorder %v98, %v38
    %vm134 = vcmp.eq.s32.totalorder %v101, %v38
    %vm135 = vcmp.eq.s32.totalorder %v104, %v38
    %vm136 = vcmp.eq.s32.totalorder %v107, %v38
    %vm137 = vcmp.eq.s32.totalorder %v110, %v38
    %vm138 = vcmp.eq.s32.totalorder %v113, %v38
    %v139 = vsel %vm114, 1, 0
    %v140 = vsel %vm115, 1, 0
    %v141 = vsel %vm116, 1, 0
    %v142 = vsel %vm117, 1, 0
    %v143 = vsel %vm118, 1, 0
    %v144 = vsel %vm119, 1, 0
    %v145 = vsel %vm120, 1, 0
    %v146 = vsel %vm121, 1, 0
    %v147 = vsel %vm122, 1, 0
    %v148 = vsel %vm123, 1, 0
    %v149 = vsel %vm124, 1, 0
    %v150 = vsel %vm125, 1, 0
    %v151 = vsel %vm126, 1, 0
    %v152 = vsel %vm127, 1, 0
    %v153 = vsel %vm128, 1, 0
    %v154 = vsel %vm129, 1, 0
    %v155 = vsel %vm130, 1, 0
    %v156 = vsel %vm131, 1, 0
    %v157 = vsel %vm132, 1, 0
    %v158 = vsel %vm133, 1, 0
    %v159 = vsel %vm134, 1, 0
    %v160 = vsel %vm135, 1, 0
    %v161 = vsel %vm136, 1, 0
    %v162 = vsel %vm137, 1, 0
    %v163 = vsel %vm138, 1, 0
    %v164 = vcvt.s32.f32 %v139
    %v165 = vcvt.s32.f32 %v140
    %v166 = vcvt.s32.f32 %v141
    %v167 = vcvt.s32.f32 %v142
    %v168 = vcvt.s32.f32 %v143
    %v169 = vcvt.s32.f32 %v144
    %v170 = vcvt.s32.f32 %v145
    %v171 = vcvt.s32.f32 %v146
    %v172 = vcvt.s32.f32 %v147
    %v173 = vcvt.s32.f32 %v148
    %v174 = vcvt.s32.f32 %v149
    %v175 = vcvt.s32.f32 %v150
    %v176 = vcvt.s32.f32 %v151
    %v177 = vcvt.s32.f32 %v152
    %v178 = vcvt.s32.f32 %v153
    %v179 = vcvt.s32.f32 %v154
    %v180 = vcvt.s32.f32 %v155
    %v181 = vcvt.s32.f32 %v156
    %v182 = vcvt.s32.f32 %v157
    %v183 = vcvt.s32.f32 %v158
    %v184 = vcvt.s32.f32 %v159
    %v185 = vcvt.s32.f32 %v160
    %v186 = vcvt.s32.f32 %v161
    %v187 = vcvt.s32.f32 %v162
    %v188 = vcvt.s32.f32 %v163
    %v189 = vadd.f32 %v164, 0.0
    %v190 = vadd.f32 %v165, 0.0
    %v191 = vadd.f32 %v166, 0.0
    %v192 = vadd.f32 %v167, 0.0
    %v193 = vadd.f32 %v168, 0.0
    %v194 = vadd.f32 %v169, 0.0
    %v195 = vadd.f32 %v170, 0.0
    %v196 = vadd.f32 %v171, 0.0
    %v197 = vadd.f32 %v172, 0.0
    %v198 = vadd.f32 %v173, 0.0
    %v199 = vadd.f32 %v174, 0.0
    %v200 = vadd.f32 %v175, 0.0
    %v201 = vadd.f32 %v176, 0.0
    %v202 = vadd.f32 %v177, 0.0
    %v203 = vadd.f32 %v178, 0.0
    %v204 = vadd.f32 %v179, 0.0
    %v205 = vadd.f32 %v180, 0.0
    %v206 = vadd.f32 %v181, 0.0
    %v207 = vadd.f32 %v182, 0.0
    %v208 = vadd.f32 %v183, 0.0
    %v209 = vadd.f32 %v184, 0.0
    %v210 = vadd.f32 %v185, 0.0
    %v211 = vadd.f32 %v186, 0.0
    %v212 = vadd.f32 %v187, 0.0
    %v213 = vadd.f32 %v188, 0.0
    %v214 = vadd.s32 %v12, 8
    %v215 = vadd.s32 %v13, 8
    %v216 = vadd.s32 %v14, 8
    %v217 = vadd.s32 %v15, 8
    %v218 = vadd.s32 %v16, 8
    %v219 = vadd.s32 %v17, 8
    %v220 = vadd.s32 %v18, 8
    %v221 = vadd.s32 %v19, 8
    %v222 = vadd.s32 %v20, 8
    %v223 = vadd.s32 %v21, 8
    %v224 = vadd.s32 %v22, 8
    %v225 = vadd.s32 %v23, 8
    %v226 = vadd.s32 %v24, 8
    %v227 = vadd.s32 %v25, 8
    %v228 = vadd.s32 %v26, 8
    %v229 = vadd.s32 %v27, 8
    %v230 = vadd.s32 %v28, 8
    %v231 = vadd.s32 %v29, 8
    %v232 = vadd.s32 %v30, 8
    %v233 = vadd.s32 %v31, 8
    %v234 = vadd.s32 %v32, 8
    %v235 = vadd.s32 %v33, 8
    %v236 = vadd.s32 %v34, 8
    %v237 = vadd.s32 %v35, 8
    %v238 = vadd.s32 %v36, 8
    %239 = vset.pattern.permute.xlu0 1
    %240 = vperm.xlu0 %239, %v214
    %v241 = vpop.permute.xlu0 %240
    %242 = vset.pattern.permute.xlu0 1
    %243 = vperm.xlu0 %242, %v215
    %v244 = vpop.permute.xlu0 %243
    %245 = vset.pattern.permute.xlu0 1
    %246 = vperm.xlu0 %245, %v216
    %v247 = vpop.permute.xlu0 %246
    %248 = vset.pattern.permute.xlu0 1
    %249 = vperm.xlu0 %248, %v217
    %v250 = vpop.permute.xlu0 %249
    %251 = vset.pattern.permute.xlu0 1
    %252 = vperm.xlu0 %251, %v218
    %v253 = vpop.permute.xlu0 %252
    %254 = vset.pattern.permute.xlu0 1
    %255 = vperm.xlu0 %254, %v219
    %v256 = vpop.permute.xlu0 %255
    %257 = vset.pattern.permute.xlu0 1
    %258 = vperm.xlu0 %257, %v220
    %v259 = vpop.permute.xlu0 %258
    %260 = vset.pattern.permute.xlu0 1
    %261 = vperm.xlu0 %260, %v221
    %v262 = vpop.permute.xlu0 %261
    %263 = vset.pattern.permute.xlu0 1
    %264 = vperm.xlu0 %263, %v222
    %v265 = vpop.permute.xlu0 %264
    %266 = vset.pattern.permute.xlu0 1
    %267 = vperm.xlu0 %266, %v223
    %v268 = vpop.permute.xlu0 %267
    %269 = vset.pattern.permute.xlu0 1
    %270 = vperm.xlu0 %269, %v224
    %v271 = vpop.permute.xlu0 %270
    %272 = vset.pattern.permute.xlu0 1
    %273 = vperm.xlu0 %272, %v225
    %v274 = vpop.permute.xlu0 %273
    %275 = vset.pattern.permute.xlu0 1
    %276 = vperm.xlu0 %275, %v226
    %v277 = vpop.permute.xlu0 %276
    %278 = vset.pattern.permute.xlu0 1
    %279 = vperm.xlu0 %278, %v227
    %v280 = vpop.permute.xlu0 %279
    %281 = vset.pattern.permute.xlu0 1
    %282 = vperm.xlu0 %281, %v228
    %v283 = vpop.permute.xlu0 %282
    %284 = vset.pattern.permute.xlu0 1
    %285 = vperm.xlu0 %284, %v229
    %v286 = vpop.permute.xlu0 %285
    %287 = vset.pattern.permute.xlu0 1
    %288 = vperm.xlu0 %287, %v230
    %v289 = vpop.permute.xlu0 %288
    %290 = vset.pattern.permute.xlu0 1
    %291 = vperm.xlu0 %290, %v231
    %v292 = vpop.permute.xlu0 %291
    %293 = vset.pattern.permute.xlu0 1
    %294 = vperm.xlu0 %293, %v232
    %v295 = vpop.permute.xlu0 %294
    %296 = vset.pattern.permute.xlu0 1
    %297 = vperm.xlu0 %296, %v233
    %v298 = vpop.permute.xlu0 %297
    %299 = vset.pattern.permute.xlu0 1
    %300 = vperm.xlu0 %299, %v234
    %v301 = vpop.permute.xlu0 %300
    %302 = vset.pattern.permute.xlu0 1
    %303 = vperm.xlu0 %302, %v235
    %v304 = vpop.permute.xlu0 %303
    %305 = vset.pattern.permute.xlu0 1
    %306 = vperm.xlu0 %305, %v236
    %v307 = vpop.permute.xlu0 %306
    %308 = vset.pattern.permute.xlu0 1
    %309 = vperm.xlu0 %308, %v237
    %v310 = vpop.permute.xlu0 %309
    %311 = vset.pattern.permute.xlu0 1
    %312 = vperm.xlu0 %311, %v238
    %v313 = vpop.permute.xlu0 %312
    %vm314 = vcmp.eq.s32.totalorder %v241, %v38
    %vm315 = vcmp.eq.s32.totalorder %v244, %v38
    %vm316 = vcmp.eq.s32.totalorder %v247, %v38
    %vm317 = vcmp.eq.s32.totalorder %v250, %v38
    %vm318 = vcmp.eq.s32.totalorder %v253, %v38
    %vm319 = vcmp.eq.s32.totalorder %v256, %v38
    %vm320 = vcmp.eq.s32.totalorder %v259, %v38
    %vm321 = vcmp.eq.s32.totalorder %v262, %v38
    %vm322 = vcmp.eq.s32.totalorder %v265, %v38
    %vm323 = vcmp.eq.s32.totalorder %v268, %v38
    %vm324 = vcmp.eq.s32.totalorder %v271, %v38
    %vm325 = vcmp.eq.s32.totalorder %v274, %v38
    %vm326 = vcmp.eq.s32.totalorder %v277, %v38
    %vm327 = vcmp.eq.s32.totalorder %v280, %v38
    %vm328 = vcmp.eq.s32.totalorder %v283, %v38
    %vm329 = vcmp.eq.s32.totalorder %v286, %v38
    %vm330 = vcmp.eq.s32.totalorder %v289, %v38
    %vm331 = vcmp.eq.s32.totalorder %v292, %v38
    %vm332 = vcmp.eq.s32.totalorder %v295, %v38
    %vm333 = vcmp.eq.s32.totalorder %v298, %v38
    %vm334 = vcmp.eq.s32.totalorder %v301, %v38
    %vm335 = vcmp.eq.s32.totalorder %v304, %v38
    %vm336 = vcmp.eq.s32.totalorder %v307, %v38
    %vm337 = vcmp.eq.s32.totalorder %v310, %v38
    %vm338 = vcmp.eq.s32.totalorder %v313, %v38
    %v339 = vsel %vm314, 1, 0
    %v340 = vsel %vm315, 1, 0
    %v341 = vsel %vm316, 1, 0
    %v342 = vsel %vm317, 1, 0
    %v343 = vsel %vm318, 1, 0
    %v344 = vsel %vm319, 1, 0
    %v345 = vsel %vm320, 1, 0
    %v346 = vsel %vm321, 1, 0
    %v347 = vsel %vm322, 1, 0
    %v348 = vsel %vm323, 1, 0
    %v349 = vsel %vm324, 1, 0
    %v350 = vsel %vm325, 1, 0
    %v351 = vsel %vm326, 1, 0
    %v352 = vsel %vm327, 1, 0
    %v353 = vsel %vm328, 1, 0
    %v354 = vsel %vm329, 1, 0
    %v355 = vsel %vm330, 1, 0
    %v356 = vsel %vm331, 1, 0
    %v357 = vsel %vm332, 1, 0
    %v358 = vsel %vm333, 1, 0
    %v359 = vsel %vm334, 1, 0
    %v360 = vsel %vm335, 1, 0
    %v361 = vsel %vm336, 1, 0
    %v362 = vsel %vm337, 1, 0
    %v363 = vsel %vm338, 1, 0
    %v364 = vcvt.s32.f32 %v339
    %v365 = vcvt.s32.f32 %v340
    %v366 = vcvt.s32.f32 %v341
    %v367 = vcvt.s32.f32 %v342
    %v368 = vcvt.s32.f32 %v343
    %v369 = vcvt.s32.f32 %v344
    %v370 = vcvt.s32.f32 %v345
    %v371 = vcvt.s32.f32 %v346
    %v372 = vcvt.s32.f32 %v347
    %v373 = vcvt.s32.f32 %v348
    %v374 = vcvt.s32.f32 %v349
    %v375 = vcvt.s32.f32 %v350
    %v376 = vcvt.s32.f32 %v351
    %v377 = vcvt.s32.f32 %v352
    %v378 = vcvt.s32.f32 %v353
    %v379 = vcvt.s32.f32 %v354
    %v380 = vcvt.s32.f32 %v355
    %v381 = vcvt.s32.f32 %v356
    %v382 = vcvt.s32.f32 %v357
    %v383 = vcvt.s32.f32 %v358
    %v384 = vcvt.s32.f32 %v359
    %v385 = vcvt.s32.f32 %v360
    %v386 = vcvt.s32.f32 %v361
    %v387 = vcvt.s32.f32 %v362
    %v388 = vcvt.s32.f32 %v363
    %v389 = vadd.f32 %v189, %v364
    %v390 = vadd.f32 %v190, %v365
    %v391 = vadd.f32 %v191, %v366
    %v392 = vadd.f32 %v192, %v367
    %v393 = vadd.f32 %v193, %v368
    %v394 = vadd.f32 %v194, %v369
    %v395 = vadd.f32 %v195, %v370
    %v396 = vadd.f32 %v196, %v371
    %v397 = vadd.f32 %v197, %v372
    %v398 = vadd.f32 %v198, %v373
    %v399 = vadd.f32 %v199, %v374
    %v400 = vadd.f32 %v200, %v375
    %v401 = vadd.f32 %v201, %v376
    %v402 = vadd.f32 %v202, %v377
    %v403 = vadd.f32 %v203, %v378
    %v404 = vadd.f32 %v204, %v379
    %v405 = vadd.f32 %v205, %v380
    %v406 = vadd.f32 %v206, %v381
    %v407 = vadd.f32 %v207, %v382
    %v408 = vadd.f32 %v208, %v383
    %v409 = vadd.f32 %v209, %v384
    %v410 = vadd.f32 %v210, %v385
    %v411 = vadd.f32 %v211, %v386
    %v412 = vadd.f32 %v212, %v387
    %v413 = vadd.f32 %v213, %v388
    %v414 = vadd.s32 %v12, 16
    %v415 = vadd.s32 %v13, 16
    %v416 = vadd.s32 %v14, 16
    %v417 = vadd.s32 %v15, 16
    %v418 = vadd.s32 %v16, 16
    %v419 = vadd.s32 %v17, 16
    %v420 = vadd.s32 %v18, 16
    %v421 = vadd.s32 %v19, 16
    %v422 = vadd.s32 %v20, 16
    %v423 = vadd.s32 %v21, 16
    %v424 = vadd.s32 %v22, 16
    %v425 = vadd.s32 %v23, 16
    %v426 = vadd.s32 %v24, 16
    %v427 = vadd.s32 %v25, 16
    %v428 = vadd.s32 %v26, 16
    %v429 = vadd.s32 %v27, 16
    %v430 = vadd.s32 %v28, 16
    %v431 = vadd.s32 %v29, 16
    %v432 = vadd.s32 %v30, 16
    %v433 = vadd.s32 %v31, 16
    %v434 = vadd.s32 %v32, 16
    %v435 = vadd.s32 %v33, 16
    %v436 = vadd.s32 %v34, 16
    %v437 = vadd.s32 %v35, 16
    %v438 = vadd.s32 %v36, 16
    %439 = vset.pattern.permute.xlu0 2
    %440 = vperm.xlu0 %439, %v414
    %v441 = vpop.permute.xlu0 %440
    %442 = vset.pattern.permute.xlu0 2
    %443 = vperm.xlu0 %442, %v415
    %v444 = vpop.permute.xlu0 %443
    %445 = vset.pattern.permute.xlu0 2
    %446 = vperm.xlu0 %445, %v416
    %v447 = vpop.permute.xlu0 %446
    %448 = vset.pattern.permute.xlu0 2
    %449 = vperm.xlu0 %448, %v417
    %v450 = vpop.permute.xlu0 %449
    %451 = vset.pattern.permute.xlu0 2
    %452 = vperm.xlu0 %451, %v418
    %v453 = vpop.permute.xlu0 %452
    %454 = vset.pattern.permute.xlu0 2
    %455 = vperm.xlu0 %454, %v419
    %v456 = vpop.permute.xlu0 %455
    %457 = vset.pattern.permute.xlu0 2
    %458 = vperm.xlu0 %457, %v420
    %v459 = vpop.permute.xlu0 %458
    %460 = vset.pattern.permute.xlu0 2
    %461 = vperm.xlu0 %460, %v421
    %v462 = vpop.permute.xlu0 %461
    %463 = vset.pattern.permute.xlu0 2
    %464 = vperm.xlu0 %463, %v422
    %v465 = vpop.permute.xlu0 %464
    %466 = vset.pattern.permute.xlu0 2
    %467 = vperm.xlu0 %466, %v423
    %v468 = vpop.permute.xlu0 %467
    %469 = vset.pattern.permute.xlu0 2
    %470 = vperm.xlu0 %469, %v424
    %v471 = vpop.permute.xlu0 %470
    %472 = vset.pattern.permute.xlu0 2
    %473 = vperm.xlu0 %472, %v425
    %v474 = vpop.permute.xlu0 %473
    %475 = vset.pattern.permute.xlu0 2
    %476 = vperm.xlu0 %475, %v426
    %v477 = vpop.permute.xlu0 %476
    %478 = vset.pattern.permute.xlu0 2
    %479 = vperm.xlu0 %478, %v427
    %v480 = vpop.permute.xlu0 %479
    %481 = vset.pattern.permute.xlu0 2
    %482 = vperm.xlu0 %481, %v428
    %v483 = vpop.permute.xlu0 %482
    %484 = vset.pattern.permute.xlu0 2
    %485 = vperm.xlu0 %484, %v429
    %v486 = vpop.permute.xlu0 %485
    %487 = vset.pattern.permute.xlu0 2
    %488 = vperm.xlu0 %487, %v430
    %v489 = vpop.permute.xlu0 %488
    %490 = vset.pattern.permute.xlu0 2
    %491 = vperm.xlu0 %490, %v431
    %v492 = vpop.permute.xlu0 %491
    %493 = vset.pattern.permute.xlu0 2
    %494 = vperm.xlu0 %493, %v432
    %v495 = vpop.permute.xlu0 %494
    %496 = vset.pattern.permute.xlu0 2
    %497 = vperm.xlu0 %496, %v433
    %v498 = vpop.permute.xlu0 %497
    %499 = vset.pattern.permute.xlu0 2
    %500 = vperm.xlu0 %499, %v434
    %v501 = vpop.permute.xlu0 %500
    %502 = vset.pattern.permute.xlu0 2
    %503 = vperm.xlu0 %502, %v435
    %v504 = vpop.permute.xlu0 %503
    %505 = vset.pattern.permute.xlu0 2
    %506 = vperm.xlu0 %505, %v436
    %v507 = vpop.permute.xlu0 %506
    %508 = vset.pattern.permute.xlu0 2
    %509 = vperm.xlu0 %508, %v437
    %v510 = vpop.permute.xlu0 %509
    %511 = vset.pattern.permute.xlu0 2
    %512 = vperm.xlu0 %511, %v438
    %v513 = vpop.permute.xlu0 %512
    %vm514 = vcmp.eq.s32.totalorder %v441, %v38
    %vm515 = vcmp.eq.s32.totalorder %v444, %v38
    %vm516 = vcmp.eq.s32.totalorder %v447, %v38
    %vm517 = vcmp.eq.s32.totalorder %v450, %v38
    %vm518 = vcmp.eq.s32.totalorder %v453, %v38
    %vm519 = vcmp.eq.s32.totalorder %v456, %v38
    %vm520 = vcmp.eq.s32.totalorder %v459, %v38
    %vm521 = vcmp.eq.s32.totalorder %v462, %v38
    %vm522 = vcmp.eq.s32.totalorder %v465, %v38
    %vm523 = vcmp.eq.s32.totalorder %v468, %v38
    %vm524 = vcmp.eq.s32.totalorder %v471, %v38
    %vm525 = vcmp.eq.s32.totalorder %v474, %v38
    %vm526 = vcmp.eq.s32.totalorder %v477, %v38
    %vm527 = vcmp.eq.s32.totalorder %v480, %v38
    %vm528 = vcmp.eq.s32.totalorder %v483, %v38
    %vm529 = vcmp.eq.s32.totalorder %v486, %v38
    %vm530 = vcmp.eq.s32.totalorder %v489, %v38
    %vm531 = vcmp.eq.s32.totalorder %v492, %v38
    %vm532 = vcmp.eq.s32.totalorder %v495, %v38
    %vm533 = vcmp.eq.s32.totalorder %v498, %v38
    %vm534 = vcmp.eq.s32.totalorder %v501, %v38
    %vm535 = vcmp.eq.s32.totalorder %v504, %v38
    %vm536 = vcmp.eq.s32.totalorder %v507, %v38
    %vm537 = vcmp.eq.s32.totalorder %v510, %v38
    %vm538 = vcmp.eq.s32.totalorder %v513, %v38
    %v539 = vsel %vm514, 1, 0
    %v540 = vsel %vm515, 1, 0
    %v541 = vsel %vm516, 1, 0
    %v542 = vsel %vm517, 1, 0
    %v543 = vsel %vm518, 1, 0
    %v544 = vsel %vm519, 1, 0
    %v545 = vsel %vm520, 1, 0
    %v546 = vsel %vm521, 1, 0
    %v547 = vsel %vm522, 1, 0
    %v548 = vsel %vm523, 1, 0
    %v549 = vsel %vm524, 1, 0
    %v550 = vsel %vm525, 1, 0
    %v551 = vsel %vm526, 1, 0
    %v552 = vsel %vm527, 1, 0
    %v553 = vsel %vm528, 1, 0
    %v554 = vsel %vm529, 1, 0
    %v555 = vsel %vm530, 1, 0
    %v556 = vsel %vm531, 1, 0
    %v557 = vsel %vm532, 1, 0
    %v558 = vsel %vm533, 1, 0
    %v559 = vsel %vm534, 1, 0
    %v560 = vsel %vm535, 1, 0
    %v561 = vsel %vm536, 1, 0
    %v562 = vsel %vm537, 1, 0
    %v563 = vsel %vm538, 1, 0
    %v564 = vcvt.s32.f32 %v539
    %v565 = vcvt.s32.f32 %v540
    %v566 = vcvt.s32.f32 %v541
    %v567 = vcvt.s32.f32 %v542
    %v568 = vcvt.s32.f32 %v543
    %v569 = vcvt.s32.f32 %v544
    %v570 = vcvt.s32.f32 %v545
    %v571 = vcvt.s32.f32 %v546
    %v572 = vcvt.s32.f32 %v547
    %v573 = vcvt.s32.f32 %v548
    %v574 = vcvt.s32.f32 %v549
    %v575 = vcvt.s32.f32 %v550
    %v576 = vcvt.s32.f32 %v551
    %v577 = vcvt.s32.f32 %v552
    %v578 = vcvt.s32.f32 %v553
    %v579 = vcvt.s32.f32 %v554
    %v580 = vcvt.s32.f32 %v555
    %v581 = vcvt.s32.f32 %v556
    %v582 = vcvt.s32.f32 %v557
    %v583 = vcvt.s32.f32 %v558
    %v584 = vcvt.s32.f32 %v559
    %v585 = vcvt.s32.f32 %v560
    %v586 = vcvt.s32.f32 %v561
    %v587 = vcvt.s32.f32 %v562
    %v588 = vcvt.s32.f32 %v563
    %v589 = vadd.f32 %v389, %v564
    %v590 = vadd.f32 %v390, %v565
    %v591 = vadd.f32 %v391, %v566
    %v592 = vadd.f32 %v392, %v567
    %v593 = vadd.f32 %v393, %v568
    %v594 = vadd.f32 %v394, %v569
    %v595 = vadd.f32 %v395, %v570
    %v596 = vadd.f32 %v396, %v571
    %v597 = vadd.f32 %v397, %v572
    %v598 = vadd.f32 %v398, %v573
    %v599 = vadd.f32 %v399, %v574
    %v600 = vadd.f32 %v400, %v575
    %v601 = vadd.f32 %v401, %v576
    %v602 = vadd.f32 %v402, %v577
    %v603 = vadd.f32 %v403, %v578
    %v604 = vadd.f32 %v404, %v579
    %v605 = vadd.f32 %v405, %v580
    %v606 = vadd.f32 %v406, %v581
    %v607 = vadd.f32 %v407, %v582
    %v608 = vadd.f32 %v408, %v583
    %v609 = vadd.f32 %v409, %v584
    %v610 = vadd.f32 %v410, %v585
    %v611 = vadd.f32 %v411, %v586
    %v612 = vadd.f32 %v412, %v587
    %v613 = vadd.f32 %v413, %v588
    %v614 = vld [vmem:[%s1] sm:$0xff]
    %v615 = vld [vmem:[%s1 + $0x8] sm:$0xff]
    %v616 = vld [vmem:[%s1 + $0x10] sm:$0xff]
    %v617 = vld [vmem:[%s1 + $0x18] sm:$0xff]
    %v618 = vld [vmem:[%s1 + $0x20] sm:$0xff]
    %v619 = vld [vmem:[%s1 + $0x28] sm:$0xff]
    %v620 = vld [vmem:[%s1 + $0x30] sm:$0xff]
    %v621 = vld [vmem:[%s1 + $0x38] sm:$0xff]
    %v622 = vld [vmem:[%s1 + $0x40] sm:$0xff]
    %vm623 = vcmask 195584
    %v625 = vsel %vm623, %v589, 0
    %v628 = vsel %vm623, %v590, 0
    %v631 = vsel %vm623, %v591, 0
    %v634 = vsel %vm623, %v592, 0
    %v637 = vsel %vm623, %v593, 0
    %v640 = vsel %vm623, %v594, 0
    %v643 = vsel %vm623, %v595, 0
    %v646 = vsel %vm623, %v596, 0
    %v649 = vsel %vm623, %v597, 0
    %v652 = vsel %vm623, %v598, 0
    %v655 = vsel %vm623, %v599, 0
    %v658 = vsel %vm623, %v600, 0
    %v661 = vsel %vm623, %v601, 0
    %v664 = vsel %vm623, %v602, 0
    %v667 = vsel %vm623, %v603, 0
    %v670 = vsel %vm623, %v604, 0
    %v673 = vsel %vm623, %v605, 0
    %v676 = vsel %vm623, %v606, 0
    %v679 = vsel %vm623, %v607, 0
    %v682 = vsel %vm623, %v608, 0
    %v685 = vsel %vm623, %v609, 0
    %v688 = vsel %vm623, %v610, 0
    %v691 = vsel %vm623, %v611, 0
    %v694 = vsel %vm623, %v612, 0
    %v697 = vsel %vm623, %v613, 0
    %699 = vmatpush.msra.mxu0 0.0
    %700 = vmatpush.msra.mxu0 0.0
    %701 = vmatpush.msra.mxu0 0.0
    %702 = vmatpush.msra.mxu0 0.0
    %703 = vmatpush.msra.mxu0 0.0
    %704 = vmatpush.msra.mxu0 0.0
    %705 = vmatpush.msra.mxu0 0.0
    %706 = vmatpush.msra.mxu0 0.0
    %707 = vmatpush.msra.mxu0 0.0
    %708 = vmatpush.msra.mxu0 0.0
    %709 = vmatpush.msra.mxu0 0.0
    %710 = vmatpush.msra.mxu0 0.0
    %711 = vmatpush.msra.mxu0 0.0
    %712 = vmatpush.msra.mxu0 %v620
    %713 = vmatpush.msra.mxu0 %v617
    %714 = vmatpush.msra.mxu0 %v614
    %715 = vmatmul.f32.gmra.mxu0 %v625
    %v716 = vpop.f32.mrf.mxu0
    %v717 = vadd.f32 0.0, %v716
    %718 = vmatmul.f32.gmra.mxu0 %v628
    %v719 = vpop.f32.mrf.mxu0
    %v720 = vadd.f32 0.0, %v719
    %721 = vmatmul.f32.gmra.mxu0 %v631
    %v722 = vpop.f32.mrf.mxu0
    %v723 = vadd.f32 0.0, %v722
    %724 = vmatmul.f32.gmra.mxu0 %v634
    %v725 = vpop.f32.mrf.mxu0
    %v726 = vadd.f32 0.0, %v725
    %727 = vmatmul.f32.gmra.mxu0 %v637
    %v728 = vpop.f32.mrf.mxu0
    %v729 = vadd.f32 0.0, %v728
    %730 = vmatmul.f32.gmra.mxu0 %v640
    %v731 = vpop.f32.mrf.mxu0
    %v732 = vadd.f32 0.0, %v731
    %733 = vmatmul.f32.gmra.mxu0 %v643
    %v734 = vpop.f32.mrf.mxu0
    %v735 = vadd.f32 0.0, %v734
    %736 = vmatmul.f32.gmra.mxu0 %v646
    %v737 = vpop.f32.mrf.mxu0
    %v738 = vadd.f32 0.0, %v737
    %739 = vmatmul.f32.gmra.mxu0 %v649
    %v740 = vpop.f32.mrf.mxu0
    %v741 = vadd.f32 0.0, %v740
    %742 = vmatmul.f32.gmra.mxu0 %v652
    %v743 = vpop.f32.mrf.mxu0
    %v744 = vadd.f32 0.0, %v743
    %745 = vmatmul.f32.gmra.mxu0 %v655
    %v746 = vpop.f32.mrf.mxu0
    %v747 = vadd.f32 0.0, %v746
    %748 = vmatmul.f32.gmra.mxu0 %v658
    %v749 = vpop.f32.mrf.mxu0
    %v750 = vadd.f32 0.0, %v749
    %751 = vmatmul.f32.gmra.mxu0 %v661
    %v752 = vpop.f32.mrf.mxu0
    %v753 = vadd.f32 0.0, %v752
    %754 = vmatmul.f32.gmra.mxu0 %v664
    %v755 = vpop.f32.mrf.mxu0
    %v756 = vadd.f32 0.0, %v755
    %757 = vmatmul.f32.gmra.mxu0 %v667
    %v758 = vpop.f32.mrf.mxu0
    %v759 = vadd.f32 0.0, %v758
    %760 = vmatmul.f32.gmra.mxu0 %v670
    %v761 = vpop.f32.mrf.mxu0
    %v762 = vadd.f32 0.0, %v761
    %763 = vmatmul.f32.gmra.mxu0 %v673
    %v764 = vpop.f32.mrf.mxu0
    %v765 = vadd.f32 0.0, %v764
    %766 = vmatmul.f32.gmra.mxu0 %v676
    %v767 = vpop.f32.mrf.mxu0
    %v768 = vadd.f32 0.0, %v767
    %769 = vmatmul.f32.gmra.mxu0 %v679
    %v770 = vpop.f32.mrf.mxu0
    %v771 = vadd.f32 0.0, %v770
    %772 = vmatmul.f32.gmra.mxu0 %v682
    %v773 = vpop.f32.mrf.mxu0
    %v774 = vadd.f32 0.0, %v773
    %775 = vmatmul.f32.gmra.mxu0 %v685
    %v776 = vpop.f32.mrf.mxu0
    %v777 = vadd.f32 0.0, %v776
    %778 = vmatmul.f32.gmra.mxu0 %v688
    %v779 = vpop.f32.mrf.mxu0
    %v780 = vadd.f32 0.0, %v779
    %781 = vmatmul.f32.gmra.mxu0 %v691
    %v782 = vpop.f32.mrf.mxu0
    %v783 = vadd.f32 0.0, %v782
    %784 = vmatmul.f32.gmra.mxu0 %v694
    %v785 = vpop.f32.mrf.mxu0
    %v786 = vadd.f32 0.0, %v785
    %787 = vmatmul.f32.gmra.mxu0 %v697
    %v788 = vpop.f32.mrf.mxu0
    %v789 = vadd.f32 0.0, %v788
    %790 = vdwg.mxu0
    %791 = vmatpush.msra.mxu0 0.0
    %792 = vmatpush.msra.mxu0 0.0
    %793 = vmatpush.msra.mxu0 0.0
    %794 = vmatpush.msra.mxu0 0.0
    %795 = vmatpush.msra.mxu0 0.0
    %796 = vmatpush.msra.mxu0 0.0
    %797 = vmatpush.msra.mxu0 0.0
    %798 = vmatpush.msra.mxu0 0.0
    %799 = vmatpush.msra.mxu0 0.0
    %800 = vmatpush.msra.mxu0 0.0
    %801 = vmatpush.msra.mxu0 0.0
    %802 = vmatpush.msra.mxu0 0.0
    %803 = vmatpush.msra.mxu0 0.0
    %804 = vmatpush.msra.mxu0 %v621
    %805 = vmatpush.msra.mxu0 %v618
    %806 = vmatpush.msra.mxu0 %v615
    %807 = vmatmul.f32.gmra.mxu0 %v625
    %v808 = vpop.f32.mrf.mxu0
    %v809 = vadd.f32 0.0, %v808
    %810 = vmatmul.f32.gmra.mxu0 %v628
    %v811 = vpop.f32.mrf.mxu0
    %v812 = vadd.f32 0.0, %v811
    %813 = vmatmul.f32.gmra.mxu0 %v631
    %v814 = vpop.f32.mrf.mxu0
    %v815 = vadd.f32 0.0, %v814
    %816 = vmatmul.f32.gmra.mxu0 %v634
    %v817 = vpop.f32.mrf.mxu0
    %v818 = vadd.f32 0.0, %v817
    %819 = vmatmul.f32.gmra.mxu0 %v637
    %v820 = vpop.f32.mrf.mxu0
    %v821 = vadd.f32 0.0, %v820
    %822 = vmatmul.f32.gmra.mxu0 %v640
    %v823 = vpop.f32.mrf.mxu0
    %v824 = vadd.f32 0.0, %v823
    %825 = vmatmul.f32.gmra.mxu0 %v643
    %v826 = vpop.f32.mrf.mxu0
    %v827 = vadd.f32 0.0, %v826
    %828 = vmatmul.f32.gmra.mxu0 %v646
    %v829 = vpop.f32.mrf.mxu0
    %v830 = vadd.f32 0.0, %v829
    %831 = vmatmul.f32.gmra.mxu0 %v649
    %v832 = vpop.f32.mrf.mxu0
    %v833 = vadd.f32 0.0, %v832
    %834 = vmatmul.f32.gmra.mxu0 %v652
    %v835 = vpop.f32.mrf.mxu0
    %v836 = vadd.f32 0.0, %v835
    %837 = vmatmul.f32.gmra.mxu0 %v655
    %v838 = vpop.f32.mrf.mxu0
    %v839 = vadd.f32 0.0, %v838
    %840 = vmatmul.f32.gmra.mxu0 %v658
    %v841 = vpop.f32.mrf.mxu0
    %v842 = vadd.f32 0.0, %v841
    %843 = vmatmul.f32.gmra.mxu0 %v661
    %v844 = vpop.f32.mrf.mxu0
    %v845 = vadd.f32 0.0, %v844
    %846 = vmatmul.f32.gmra.mxu0 %v664
    %v847 = vpop.f32.mrf.mxu0
    %v848 = vadd.f32 0.0, %v847
    %849 = vmatmul.f32.gmra.mxu0 %v667
    %v850 = vpop.f32.mrf.mxu0
    %v851 = vadd.f32 0.0, %v850
    %852 = vmatmul.f32.gmra.mxu0 %v670
    %v853 = vpop.f32.mrf.mxu0
    %v854 = vadd.f32 0.0, %v853
    %855 = vmatmul.f32.gmra.mxu0 %v673
    %v856 = vpop.f32.mrf.mxu0
    %v857 = vadd.f32 0.0, %v856
    %858 = vmatmul.f32.gmra.mxu0 %v676
    %v859 = vpop.f32.mrf.mxu0
    %v860 = vadd.f32 0.0, %v859
    %861 = vmatmul.f32.gmra.mxu0 %v679
    %v862 = vpop.f32.mrf.mxu0
    %v863 = vadd.f32 0.0, %v862
    %864 = vmatmul.f32.gmra.mxu0 %v682
    %v865 = vpop.f32.mrf.mxu0
    %v866 = vadd.f32 0.0, %v865
    %867 = vmatmul.f32.gmra.mxu0 %v685
    %v868 = vpop.f32.mrf.mxu0
    %v869 = vadd.f32 0.0, %v868
    %870 = vmatmul.f32.gmra.mxu0 %v688
    %v871 = vpop.f32.mrf.mxu0
    %v872 = vadd.f32 0.0, %v871
    %873 = vmatmul.f32.gmra.mxu0 %v691
    %v874 = vpop.f32.mrf.mxu0
    %v875 = vadd.f32 0.0, %v874
    %876 = vmatmul.f32.gmra.mxu0 %v694
    %v877 = vpop.f32.mrf.mxu0
    %v878 = vadd.f32 0.0, %v877
    %879 = vmatmul.f32.gmra.mxu0 %v697
    %v880 = vpop.f32.mrf.mxu0
    %v881 = vadd.f32 0.0, %v880
    %882 = vdwg.mxu0
    %883 = vmatpush.msra.mxu0 0.0
    %884 = vmatpush.msra.mxu0 0.0
    %885 = vmatpush.msra.mxu0 0.0
    %886 = vmatpush.msra.mxu0 0.0
    %887 = vmatpush.msra.mxu0 0.0
    %888 = vmatpush.msra.mxu0 0.0
    %889 = vmatpush.msra.mxu0 0.0
    %890 = vmatpush.msra.mxu0 0.0
    %891 = vmatpush.msra.mxu0 0.0
    %892 = vmatpush.msra.mxu0 0.0
    %893 = vmatpush.msra.mxu0 0.0
    %894 = vmatpush.msra.mxu0 0.0
    %895 = vmatpush.msra.mxu0 0.0
    %896 = vmatpush.msra.mxu0 %v622
    %897 = vmatpush.msra.mxu0 %v619
    %898 = vmatpush.msra.mxu0 %v616
    %899 = vmatmul.f32.gmra.mxu0 %v625
    %v900 = vpop.f32.mrf.mxu0
    %v901 = vadd.f32 0.0, %v900
    %902 = vmatmul.f32.gmra.mxu0 %v628
    %v903 = vpop.f32.mrf.mxu0
    %v904 = vadd.f32 0.0, %v903
    %905 = vmatmul.f32.gmra.mxu0 %v631
    %v906 = vpop.f32.mrf.mxu0
    %v907 = vadd.f32 0.0, %v906
    %908 = vmatmul.f32.gmra.mxu0 %v634
    %v909 = vpop.f32.mrf.mxu0
    %v910 = vadd.f32 0.0, %v909
    %911 = vmatmul.f32.gmra.mxu0 %v637
    %v912 = vpop.f32.mrf.mxu0
    %v913 = vadd.f32 0.0, %v912
    %914 = vmatmul.f32.gmra.mxu0 %v640
    %v915 = vpop.f32.mrf.mxu0
    %v916 = vadd.f32 0.0, %v915
    %917 = vmatmul.f32.gmra.mxu0 %v643
    %v918 = vpop.f32.mrf.mxu0
    %v919 = vadd.f32 0.0, %v918
    %920 = vmatmul.f32.gmra.mxu0 %v646
    %v921 = vpop.f32.mrf.mxu0
    %v922 = vadd.f32 0.0, %v921
    %923 = vmatmul.f32.gmra.mxu0 %v649
    %v924 = vpop.f32.mrf.mxu0
    %v925 = vadd.f32 0.0, %v924
    %926 = vmatmul.f32.gmra.mxu0 %v652
    %v927 = vpop.f32.mrf.mxu0
    %v928 = vadd.f32 0.0, %v927
    %929 = vmatmul.f32.gmra.mxu0 %v655
    %v930 = vpop.f32.mrf.mxu0
    %v931 = vadd.f32 0.0, %v930
    %932 = vmatmul.f32.gmra.mxu0 %v658
    %v933 = vpop.f32.mrf.mxu0
    %v934 = vadd.f32 0.0, %v933
    %935 = vmatmul.f32.gmra.mxu0 %v661
    %v936 = vpop.f32.mrf.mxu0
    %v937 = vadd.f32 0.0, %v936
    %938 = vmatmul.f32.gmra.mxu0 %v664
    %v939 = vpop.f32.mrf.mxu0
    %v940 = vadd.f32 0.0, %v939
    %941 = vmatmul.f32.gmra.mxu0 %v667
    %v942 = vpop.f32.mrf.mxu0
    %v943 = vadd.f32 0.0, %v942
    %944 = vmatmul.f32.gmra.mxu0 %v670
    %v945 = vpop.f32.mrf.mxu0
    %v946 = vadd.f32 0.0, %v945
    %947 = vmatmul.f32.gmra.mxu0 %v673
    %v948 = vpop.f32.mrf.mxu0
    %v949 = vadd.f32 0.0, %v948
    %950 = vmatmul.f32.gmra.mxu0 %v676
    %v951 = vpop.f32.mrf.mxu0
    %v952 = vadd.f32 0.0, %v951
    %953 = vmatmul.f32.gmra.mxu0 %v679
    %v954 = vpop.f32.mrf.mxu0
    %v955 = vadd.f32 0.0, %v954
    %956 = vmatmul.f32.gmra.mxu0 %v682
    %v957 = vpop.f32.mrf.mxu0
    %v958 = vadd.f32 0.0, %v957
    %959 = vmatmul.f32.gmra.mxu0 %v685
    %v960 = vpop.f32.mrf.mxu0
    %v961 = vadd.f32 0.0, %v960
    %962 = vmatmul.f32.gmra.mxu0 %v688
    %v963 = vpop.f32.mrf.mxu0
    %v964 = vadd.f32 0.0, %v963
    %965 = vmatmul.f32.gmra.mxu0 %v691
    %v966 = vpop.f32.mrf.mxu0
    %v967 = vadd.f32 0.0, %v966
    %968 = vmatmul.f32.gmra.mxu0 %v694
    %v969 = vpop.f32.mrf.mxu0
    %v970 = vadd.f32 0.0, %v969
    %971 = vmatmul.f32.gmra.mxu0 %v697
    %v972 = vpop.f32.mrf.mxu0
    %v973 = vadd.f32 0.0, %v972
    %974 = vdwg.mxu0
    %975 = vst [vmem:[#allocation2] sm:$0xff] %v717
    %976 = vst [vmem:[#allocation2 + $0x8] sm:$0xff] %v809
    %vm977 = vcmask 359424
    %978 = vst.msk [vmem:[#allocation2 + $0x10] sm:$0xff] %vm977, %v901
    %979 = vst [vmem:[#allocation2 + $0x18] sm:$0xff] %v720
    %980 = vst [vmem:[#allocation2 + $0x20] sm:$0xff] %v812
    %981 = vst.msk [vmem:[#allocation2 + $0x28] sm:$0xff] %vm977, %v904
    %982 = vst [vmem:[#allocation2 + $0x30] sm:$0xff] %v723
    %983 = vst [vmem:[#allocation2 + $0x38] sm:$0xff] %v815
    %984 = vst.msk [vmem:[#allocation2 + $0x40] sm:$0xff] %vm977, %v907
    %985 = vst [vmem:[#allocation2 + $0x48] sm:$0xff] %v726
    %986 = vst [vmem:[#allocation2 + $0x50] sm:$0xff] %v818
    %987 = vst.msk [vmem:[#allocation2 + $0x58] sm:$0xff] %vm977, %v910
    %988 = vst [vmem:[#allocation2 + $0x60] sm:$0xff] %v729
    %989 = vst [vmem:[#allocation2 + $0x68] sm:$0xff] %v821
    %990 = vst.msk [vmem:[#allocation2 + $0x70] sm:$0xff] %vm977, %v913
    %991 = vst [vmem:[#allocation2 + $0x78] sm:$0xff] %v732
    %992 = vst [vmem:[#allocation2 + $0x80] sm:$0xff] %v824
    %993 = vst.msk [vmem:[#allocation2 + $0x88] sm:$0xff] %vm977, %v916
    %994 = vst [vmem:[#allocation2 + $0x90] sm:$0xff] %v735
    %995 = vst [vmem:[#allocation2 + $0x98] sm:$0xff] %v827
    %996 = vst.msk [vmem:[#allocation2 + $0xa0] sm:$0xff] %vm977, %v919
    %997 = vst [vmem:[#allocation2 + $0xa8] sm:$0xff] %v738
    %998 = vst [vmem:[#allocation2 + $0xb0] sm:$0xff] %v830
    %999 = vst.msk [vmem:[#allocation2 + $0xb8] sm:$0xff] %vm977, %v922
    %1000 = vst [vmem:[#allocation2 + $0xc0] sm:$0xff] %v741
    %1001 = vst [vmem:[#allocation2 + $0xc8] sm:$0xff] %v833
    %1002 = vst.msk [vmem:[#allocation2 + $0xd0] sm:$0xff] %vm977, %v925
    %1003 = vst [vmem:[#allocation2 + $0xd8] sm:$0xff] %v744
    %1004 = vst [vmem:[#allocation2 + $0xe0] sm:$0xff] %v836
    %1005 = vst.msk [vmem:[#allocation2 + $0xe8] sm:$0xff] %vm977, %v928
    %1006 = vst [vmem:[#allocation2 + $0xf0] sm:$0xff] %v747
    %1007 = vst [vmem:[#allocation2 + $0xf8] sm:$0xff] %v839
    %1008 = vst.msk [vmem:[#allocation2 + $0x100] sm:$0xff] %vm977, %v931
    %1009 = vst [vmem:[#allocation2 + $0x108] sm:$0xff] %v750
    %1010 = vst [vmem:[#allocation2 + $0x110] sm:$0xff] %v842
    %1011 = vst.msk [vmem:[#allocation2 + $0x118] sm:$0xff] %vm977, %v934
    %1012 = vst [vmem:[#allocation2 + $0x120] sm:$0xff] %v753
    %1013 = vst [vmem:[#allocation2 + $0x128] sm:$0xff] %v845
    %1014 = vst.msk [vmem:[#allocation2 + $0x130] sm:$0xff] %vm977, %v937
    %1015 = vst [vmem:[#allocation2 + $0x138] sm:$0xff] %v756
    %1016 = vst [vmem:[#allocation2 + $0x140] sm:$0xff] %v848
    %1017 = vst.msk [vmem:[#allocation2 + $0x148] sm:$0xff] %vm977, %v940
    %1018 = vst [vmem:[#allocation2 + $0x150] sm:$0xff] %v759
    %1019 = vst [vmem:[#allocation2 + $0x158] sm:$0xff] %v851
    %1020 = vst.msk [vmem:[#allocation2 + $0x160] sm:$0xff] %vm977, %v943
    %1021 = vst [vmem:[#allocation2 + $0x168] sm:$0xff] %v762
    %1022 = vst [vmem:[#allocation2 + $0x170] sm:$0xff] %v854
    %1023 = vst.msk [vmem:[#allocation2 + $0x178] sm:$0xff] %vm977, %v946
    %1024 = vst [vmem:[#allocation2 + $0x180] sm:$0xff] %v765
    %1025 = vst [vmem:[#allocation2 + $0x188] sm:$0xff] %v857
    %1026 = vst.msk [vmem:[#allocation2 + $0x190] sm:$0xff] %vm977, %v949
    %1027 = vst [vmem:[#allocation2 + $0x198] sm:$0xff] %v768
    %1028 = vst [vmem:[#allocation2 + $0x1a0] sm:$0xff] %v860
    %1029 = vst.msk [vmem:[#allocation2 + $0x1a8] sm:$0xff] %vm977, %v952
    %1030 = vst [vmem:[#allocation2 + $0x1b0] sm:$0xff] %v771
    %1031 = vst [vmem:[#allocation2 + $0x1b8] sm:$0xff] %v863
    %1032 = vst.msk [vmem:[#allocation2 + $0x1c0] sm:$0xff] %vm977, %v955
    %1033 = vst [vmem:[#allocation2 + $0x1c8] sm:$0xff] %v774
    %1034 = vst [vmem:[#allocation2 + $0x1d0] sm:$0xff] %v866
    %1035 = vst.msk [vmem:[#allocation2 + $0x1d8] sm:$0xff] %vm977, %v958
    %1036 = vst [vmem:[#allocation2 + $0x1e0] sm:$0xff] %v777
    %1037 = vst [vmem:[#allocation2 + $0x1e8] sm:$0xff] %v869
    %1038 = vst.msk [vmem:[#allocation2 + $0x1f0] sm:$0xff] %vm977, %v961
    %1039 = vst [vmem:[#allocation2 + $0x1f8] sm:$0xff] %v780
    %1040 = vst [vmem:[#allocation2 + $0x200] sm:$0xff] %v872
    %1041 = vst.msk [vmem:[#allocation2 + $0x208] sm:$0xff] %vm977, %v964
    %1042 = vst [vmem:[#allocation2 + $0x210] sm:$0xff] %v783
    %1043 = vst [vmem:[#allocation2 + $0x218] sm:$0xff] %v875
    %1044 = vst.msk [vmem:[#allocation2 + $0x220] sm:$0xff] %vm977, %v967
    %1045 = vst [vmem:[#allocation2 + $0x228] sm:$0xff] %v786
    %1046 = vst [vmem:[#allocation2 + $0x230] sm:$0xff] %v878
    %1047 = vst.msk [vmem:[#allocation2 + $0x238] sm:$0xff] %vm977, %v970
    %1048 = vst [vmem:[#allocation2 + $0x240] sm:$0xff] %v789
    %1049 = vst [vmem:[#allocation2 + $0x248] sm:$0xff] %v881
    %1050 = vst.msk [vmem:[#allocation2 + $0x250] sm:$0xff] %vm977, %v973
    // Predicated region
    $region10: #{tpu_custom_call.1} parent=1 // pred_check
      _
    $region11: #{tpu_custom_call.1} parent=1 // pred_check_branch
      %1052 = sbr.rel (0) target = $region13
    $region12: #{tpu_custom_call.1} parent=1 // pred_region
      %1054 = vsyncadd [#allocation3], 0
      %s1055 = sshll.u32 [#allocation2], 4
      %s1056 = int_to_ptr.vmem [resolvable:$true] %s1055
      %s1057 = sshll.u32 %s2, 4
      %s1058 = int_to_ptr.hbm [resolvable:$true] %s1057
      %1063 = dma.vmem_to_hbm [thread:$0]  %s1056, 9600, %s1058, [#allocation3], 384, 384, 24
    $region13: #{tpu_custom_call.1} parent=1 // pred_fallthru
      _
    // Predicated region
    $region14: #{tpu_custom_call.1} parent=1 // pred_check
      _
    $region15: #{tpu_custom_call.1} parent=1 // pred_check_branch
      %1065 = sbr.rel (0) target = $region17
    $region16: #{tpu_custom_call.1} parent=1 // pred_region
      %1067 = dma.done [#allocation3], 9600
    $region17: #{tpu_custom_call.1} parent=1 // pred_fallthru
      _
    %1068 = vsyncpa [#allocation3], 1

</llo_original>
